<compile_context>
chip_gen: v7x
topology: tpu7x:2x2x1
jax: 0.10.0
libtpu: 0.0.40
codegen_flags: <defaults>
</compile_context>

<pallas_src>
import collections
from functools import partial
from itertools import product

import numpy as np
import jax
import jax.numpy as jnp
from jax.experimental import pallas as pl
from jax.experimental.pallas import tpu as pltpu

N_CONCEPTS = 21
OBS_COL = 21                 # spare concept lane holding the folded obstacle OR
N_WORLDS = 192               # 64 Forward/Stop + 64 Left + 64 Right
N_WORLDS_PAD = 256           # lane-padded world axis (zero-padded worlds)
EPS = 1e-5


# ---------------------------------------------------------------------------
# Logic tables (host-side, deterministic).
# ---------------------------------------------------------------------------
def create_w_to_y():
    # OR over 4 bits: world 0 (all zeros) -> [1, 0], everything else -> [0, 1].
    m = np.concatenate([np.zeros((16, 1)), np.ones((16, 1))], axis=1).astype(np.float32)
    m[0] = np.array([1.0, 0.0], dtype=np.float32)
    return m


def build_world_queries_matrix_FS():
    w_q = np.zeros((64, 4), dtype=np.float32)
    for w, (g, f, c, r, s, o) in enumerate(product(range(2), repeat=6)):
        stop = 1 if (r or s or o) else 0
        fwd = 1 if ((g or f or c) and not stop) else 0
        w_q[w, 0 + fwd] = 1.0    # columns [P(F=0), P(F=1)]
        w_q[w, 2 + stop] = 1.0   # columns [P(S=0), P(S=1)]
    return w_q


def build_world_queries_matrix_side():
    w_q = np.zeros((64, 2), dtype=np.float32)
    for w, (lane, green, follow, no_lane, obs, line) in enumerate(product(range(2), repeat=6)):
        turn = 1 if ((lane or green or follow) and not (no_lane or obs or line)) else 0
        w_q[w, turn] = 1.0       # columns [P(turn=0), P(turn=1)]
    return w_q


def build_selection_tables(fs_q, l_q, r_q):
    """Build the fused 0/1 selection matrix SEL (256, 256) and the fused,
    lane-padded block-diagonal query matrix Q (256, 128).

    SEL rows:     row c        selects log P(concept c = 0)
                  row 128 + c  selects log P(concept c = 1)
                  (the obstacle OR lives in the spare concept lane OBS_COL=21)
    SEL columns (worlds):
      [  0,  64): Forward/Stop over (tl_green, follow, clear, tl_red, t_sign, obs), MSB-first
      [ 64, 128): Left-turn over concepts 9..14 (MSB-first)
      [128, 192): Right-turn over concepts 15..20 (MSB-first)
      [192, 256): zero padding (exp(0)=1 but the matching Q rows are zero)
    Q columns: [FS(4) | Left(2) | Right(2) | 0 ... 0] (padded to 128 lanes).
    """
    sel = np.zeros((256, N_WORLDS_PAD), np.float32)
    q = np.zeros((N_WORLDS_PAD, 128), np.float32)

    fs_vars = [0, 1, 2, 3, 4, OBS_COL]
    for w in range(64):
        bits = [(w >> (5 - j)) & 1 for j in range(6)]
        for cid, b in zip(fs_vars, bits):
            sel[cid + (128 if b else 0), w] = 1.0
        q[w, 0:4] = fs_q[w]

    for base, var_ids, qm, c0 in ((64, list(range(9, 15)), l_q, 4),
                                  (128, list(range(15, 21)), r_q, 6)):
        for w in range(64):
            bits = [(w >> (5 - j)) & 1 for j in range(6)]
            for cid, b in zip(var_ids, bits):
                sel[cid + (128 if b else 0), base + w] = 1.0
            q[base + w, c0:c0 + 2] = qm[w]

    return sel, q


# ---------------------------------------------------------------------------
# Kernel bodies.
# ---------------------------------------------------------------------------
def _dpl_epilogue(logits, sel_ref, q_ref, out_ref):
    """sigmoid -> normalized concept probs -> log-space world selection ->
    world queries, all fused.  logits: (TB, 128) f32."""
    inv_z = 1.0 / (1.0 + 2.0 * EPS)
    c = jax.nn.sigmoid(logits)
    p0 = ((1.0 - c) + EPS) * inv_z            # P(concept = 0), normalized
    p1 = (c + EPS) * inv_z                    # P(concept = 1), normalized
    lp0 = jnp.log(p0)
    lp1 = jnp.log(p1)

    # Obstacle = OR(concepts 5..8): P(obs=0) = prod P(c_i=0); P(obs=1) = 1 - P(obs=0).
    col = jax.lax.broadcasted_iota(jnp.int32, logits.shape, 1)
    obs_mask = jnp.logical_and(col >= 5, col <= 8)
    lp_obs0 = jnp.sum(jnp.where(obs_mask, lp0, 0.0), axis=-1, keepdims=True)   # (TB, 1)
    lp_obs1 = jnp.log(1.0 - jnp.exp(lp_obs0))                                  # (TB, 1)
    lp0 = jnp.where(col == OBS_COL, lp_obs0, lp0)
    lp1 = jnp.where(col == OBS_COL, lp_obs1, lp1)

    # Single fused K=256 selection matmul over all 192 (padded 256) worlds.
    lp = jnp.concatenate([lp0, lp1], axis=-1)                                  # (TB, 256)
    lw = jnp.dot(lp, sel_ref[...], preferred_element_type=jnp.float32)         # (TB, 256)
    worlds = jnp.exp(lw)
    pred = jnp.dot(worlds, q_ref[...], preferred_element_type=jnp.float32)     # (TB, 128)
    out_ref[...] = (pred + EPS) * inv_z       # lane-dense store; wrapper slices [:, :8]


def dpl_auc_kernel_resident(x_ref, wc_ref, bc_ref, sel_ref, q_ref, out_ref):
    """Common path: wc fully VMEM-resident, 1-D batch grid."""
    logits = jnp.dot(x_ref[...], wc_ref[...],
                     preferred_element_type=jnp.float32) + bc_ref[...]
    _dpl_epilogue(logits, sel_ref, q_ref, out_ref)


def dpl_auc_kernel_ktiled(x_ref, wc_ref, bc_ref, sel_ref, q_ref, out_ref, acc_ref):
    """Fallback path for very large D: contraction tiled over the last grid axis."""
    k = pl.program_id(1)

    @pl.when(k == 0)
    def _():
        # Fold the bias into the accumulator init.
        acc_ref[...] = jnp.broadcast_to(bc_ref[...], acc_ref.shape)

    acc_ref[...] += jnp.dot(x_ref[...], wc_ref[...],
                            preferred_element_type=jnp.float32)

    @pl.when(k == pl.num_programs(1) - 1)
    def _():
        _dpl_epilogue(acc_ref[...], sel_ref, q_ref, out_ref)


# ---------------------------------------------------------------------------
# Tiling / wrapper.
# ---------------------------------------------------------------------------
Plan = collections.namedtuple(
    "Plan", ["resident", "tb", "tk", "nk", "d_pad", "b_pad", "vmem_limit"])


def _round_up(v, m):
    return ((v + m - 1) // m) * m


def _vmem_capacity_bytes():
    cap = 64 * 1024 * 1024                    # conservative fallback (v7x per-core VMEM)
    try:
        info = pltpu.get_tpu_info()
        c = int(getattr(info, "vmem_capacity_bytes", 0) or 0)
        if (16 << 20) <= c <= (1 << 30):
            cap = c
    except Exception:
        pass
    return cap


def _clamp_tb(tb, b_pad8, tb_cap):
    tb = max(8, min(int(tb), int(tb_cap), int(b_pad8)))
    # Ensure >= 2 batch tiles when the padded batch allows it, so the "parallel"
    # axis shards across both TensorCores on v7x (negligible cost on v5e/v6e).
    if tb >= b_pad8 and b_pad8 >= 16:
        tb = _round_up((b_pad8 + 1) // 2, 8)
    return tb


def _plan_tiles(batch, d, budget, force_ktiled=False):
    d128 = _round_up(max(d, 1), 128)
    b_pad8 = _round_up(max(batch, 1), 8)
    tb_cap = 2048 if budget >= (80 << 20) else 1024
    # Resident tables (SEL, Q, bias), conservatively counted double-buffered.
    tables = 2 * (N_WORLDS_PAD * N_WORLDS_PAD * 4 + N_WORLDS_PAD * 128 * 4 + 8 * 128 * 4)
    headroom = 4 << 20                         # compiler scratch / misc temporaries

    if not force_ktiled:
        # Path A: wc fully VMEM resident, no contraction grid axis.
        wc_bytes = 2 * d128 * 128 * 4
        per_row = 2 * d128 * 4 + 2 * 128 * 4 + 6 * 256 * 4   # x(x2) + out(x2) + epilogue temps
        avail = budget - tables - headroom - wc_bytes
        if avail >= 8 * per_row:
            tb = _clamp_tb((avail // per_row) // 8 * 8, b_pad8, tb_cap)
            return dict(resident=True, tb=tb, tk=d128, nk=1, d_pad=d128)

    # Path B: stream wc along a k ("arbitrary") grid axis with an f32 accumulator.
    tk_cap = 2048
    if force_ktiled and d128 >= 256:
        tk_cap = max(128, min(512, (d128 // 2) // 128 * 128))
    while True:
        nk = max(1, -(-d128 // tk_cap))
        tk = _round_up(-(-d128 // nk), 128)                  # minimal padding: d_pad = nk*tk
        fixed = tables + headroom + 2 * tk * 128 * 4         # streamed wc tile (x2 buffers)
        per_row = 2 * tk * 4 + 3 * 128 * 4 + 6 * 256 * 4     # x(x2) + acc + out(x2) + temps
        avail = budget - fixed
        if avail >= 8 * per_row or tk_cap <= 128:
            tb = _clamp_tb((max(avail, 0) // per_row) // 8 * 8, b_pad8, tb_cap)
            return dict(resident=False, tb=tb, tk=tk, nk=nk, d_pad=nk * tk)
        tk_cap = max(128, tk_cap // 2)


@partial(jax.jit, static_argnums=(5,))
def _dpl_launch(x_flat, wc_p, bc_p, sel, q_pad, plan):
    tb, tk, nk, d_pad, b_pad = plan.tb, plan.tk, plan.nk, plan.d_pad, plan.b_pad

    if plan.resident:
        return pl.pallas_call(
            dpl_auc_kernel_resident,
            out_shape=jax.ShapeDtypeStruct((b_pad, 128), jnp.float32),
            grid=(b_pad // tb,),
            in_specs=[
                pl.BlockSpec((tb, d_pad), lambda i: (i, 0)),                 # x tile
                pl.BlockSpec((d_pad, 128), lambda i: (0, 0)),                # wc (resident)
                pl.BlockSpec((1, 128), lambda i: (0, 0)),                    # bias (resident)
                pl.BlockSpec((256, N_WORLDS_PAD), lambda i: (0, 0)),         # SEL (resident)
                pl.BlockSpec((N_WORLDS_PAD, 128), lambda i: (0, 0)),         # Q (resident)
            ],
            out_specs=pl.BlockSpec((tb, 128), lambda i: (i, 0)),
            compiler_params=pltpu.CompilerParams(
                dimension_semantics=("parallel",),
                vmem_limit_bytes=plan.vmem_limit),
        )(x_flat, wc_p, bc_p, sel, q_pad)

    return pl.pallas_call(
        dpl_auc_kernel_ktiled,
        out_shape=jax.ShapeDtypeStruct((b_pad, 128), jnp.float32),
        grid=(b_pad // tb, nk),
        in_specs=[
            pl.BlockSpec((tb, tk), lambda i, k: (i, k)),                     # x tile
            pl.BlockSpec((tk, 128), lambda i, k: (k, 0)),                    # wc tile
            pl.BlockSpec((1, 128), lambda i, k: (0, 0)),                     # bias (resident)
            pl.BlockSpec((256, N_WORLDS_PAD), lambda i, k: (0, 0)),          # SEL (resident)
            pl.BlockSpec((N_WORLDS_PAD, 128), lambda i, k: (0, 0)),          # Q (resident)
        ],
        out_specs=pl.BlockSpec((tb, 128), lambda i, k: (i, 0)),
        scratch_shapes=[pltpu.VMEM((tb, 128), jnp.float32)],
        compiler_params=pltpu.CompilerParams(
            dimension_semantics=("parallel", "arbitrary"),
            vmem_limit_bytes=plan.vmem_limit),
    )(x_flat, wc_p, bc_p, sel, q_pad)


def dpl_auc_forward(x, wc, bc, sel, q_pad, *, force_ktiled=False):
    # x: (B, C, H, W) NCHW -> flatten row-major to (B, D), same as torch view(B, -1).
    batch = int(x.shape[0])
    d = int(np.prod(x.shape[1:]))

    cap = _vmem_capacity_bytes()
    budget = (cap * 3) // 4
    vmem_limit = int(max(budget, min(budget + (8 << 20), cap - (4 << 20))))

    p = _plan_tiles(batch, d, budget, force_ktiled=force_ktiled)
    b_pad = _round_up(batch, p["tb"])
    plan = Plan(bool(p["resident"]), int(p["tb"]), int(p["tk"]), int(p["nk"]),
                int(p["d_pad"]), int(b_pad), int(vmem_limit))

    x_flat = jnp.asarray(x, jnp.float32).reshape(batch, d)
    if b_pad != batch or plan.d_pad != d:
        x_flat = jnp.pad(x_flat, ((0, b_pad - batch), (0, plan.d_pad - d)))
    n_c = wc.shape[1]
    wc_p = jnp.pad(jnp.asarray(wc, jnp.float32), ((0, plan.d_pad - d), (0, 128 - n_c)))
    bc_p = jnp.pad(jnp.asarray(bc, jnp.float32).reshape(1, n_c), ((0, 0), (0, 128 - n_c)))

    out = _dpl_launch(x_flat, wc_p, bc_p, sel, q_pad, plan)
    return out[:batch, :8]


# ---------------------------------------------------------------------------
# Pure numpy reference (mirrors the torch unsqueeze/multiply/view semantics).
# ---------------------------------------------------------------------------
def reference_forward(x, wc, bc, or4, fs_q, l_q, r_q):
    xf = np.asarray(x, np.float64).reshape(x.shape[0], -1)
    logits = xf @ np.asarray(wc, np.float64) + np.asarray(bc, np.float64)
    c = 1.0 / (1.0 + np.exp(-logits))
    p1u = c + EPS
    p0u = (1.0 - c) + EPS
    z = p0u + p1u
    pC = np.stack([p0u / z, p1u / z], axis=2)                      # (B, 21, 2)

    def outer(ids, extra=None):
        vs = [pC[:, j, :] for j in ids]
        if extra is not None:
            vs.append(extra)
        w = vs[0]
        for v in vs[1:]:
            w = (w[:, :, None] * v[:, None, :]).reshape(w.shape[0], -1)
        return w

    obs = outer([5, 6, 7, 8]) @ np.asarray(or4, np.float64)
    labels_fs = outer([0, 1, 2, 3, 4], obs) @ np.asarray(fs_q, np.float64)
    label_l = outer([9, 10, 11, 12, 13, 14]) @ np.asarray(l_q, np.float64)
    label_r = outer([15, 16, 17, 18, 19, 20]) @ np.asarray(r_q, np.float64)
    pred = np.concatenate([labels_fs, label_l, label_r], axis=1)
    return (pred + EPS) / (1.0 + 2.0 * EPS)


if __name__ == "__main__":
    # Small deterministic example: B=2, C=4, H=W=16  ->  D = 1024.
    key = jax.random.PRNGKey(0)
    kx, kw, kb = jax.random.split(key, 3)

    B, C, H, W = 2, 4, 16, 16
    D = C * H * W

    x = jax.random.normal(kx, (B, C, H, W), dtype=jnp.float32)
    wc = jax.random.normal(kw, (D, N_CONCEPTS), dtype=jnp.float32) * 0.05
    bc = jax.random.normal(kb, (1, N_CONCEPTS), dtype=jnp.float32) * 0.1

    or4_np = create_w_to_y()                                       # (16, 2)  (reference only)
    fs_np = build_world_queries_matrix_FS()                        # (64, 4)
    l_np = build_world_queries_matrix_side()                       # (64, 2)
    r_np = build_world_queries_matrix_side()                       # (64, 2)
    sel_np, q_np = build_selection_tables(fs_np, l_np, r_np)
    sel = jnp.asarray(sel_np)
    q_pad = jnp.asarray(q_np)

    ref = reference_forward(np.asarray(x), np.asarray(wc), np.asarray(bc),
                            or4_np, fs_np, l_np, r_np)

    # Primary (wc-resident) path.
    out_a = jax.block_until_ready(dpl_auc_forward(x, wc, bc, sel, q_pad))
    assert out_a.shape == (B, 8), out_a.shape
    err_a = float(np.abs(np.asarray(out_a) - ref).max())
    assert np.allclose(np.asarray(out_a), ref, rtol=1e-4, atol=1e-4), err_a

    # Also exercise the k-tiled accumulator path (used when wc exceeds VMEM).
    out_b = jax.block_until_ready(dpl_auc_forward(x, wc, bc, sel, q_pad,
                                                  force_ktiled=True))
    err_b = float(np.abs(np.asarray(out_b) - ref).max())
    assert np.allclose(np.asarray(out_b), ref, rtol=1e-4, atol=1e-4), err_b

    print("KERNEL_OK")
</pallas_src>

<mosaic_0001>
module attributes {stable_mosaic.version = 11 : i64} {
  func.func @dpl_auc_kernel_resident(%arg0: i32, %arg1: memref<8x1024xf32, #tpu.memory_space<vmem>>, %arg2: memref<1024x128xf32, #tpu.memory_space<vmem>>, %arg3: memref<1x128xf32, #tpu.memory_space<vmem>>, %arg4: memref<256x256xf32, #tpu.memory_space<vmem>>, %arg5: memref<256x128xf32, #tpu.memory_space<vmem>>, %arg6: memref<8x128xf32, #tpu.memory_space<vmem>>) attributes {dimension_semantics = [#tpu.dimension_semantics<parallel>], iteration_bounds = array<i64: 1>, scalar_prefetch = 0 : i64, scratch_operands = 0 : i64, tpu.core_type = #tpu.core_type<tc>, window_params = [{transform_indices = @transform_0, window_bounds = array<i64: 8, 1024>}, {pipeline_mode = #tpu.pipeline_mode<synchronous>, transform_indices = @transform_1, window_bounds = array<i64: 1024, 128>}, {pipeline_mode = #tpu.pipeline_mode<synchronous>, transform_indices = @transform_2, window_bounds = array<i64: 1, 128>}, {pipeline_mode = #tpu.pipeline_mode<synchronous>, transform_indices = @transform_3, window_bounds = array<i64: 256, 256>}, {pipeline_mode = #tpu.pipeline_mode<synchronous>, transform_indices = @transform_4, window_bounds = array<i64: 256, 128>}, {transform_indices = @transform_5, window_bounds = array<i64: 8, 128>}]} {
    %c0 = arith.constant 0 : index
    %c0_0 = arith.constant 0 : index
    %0 = vector.load %arg1[%c0, %c0_0] : memref<8x1024xf32, #tpu.memory_space<vmem>>, vector<8x1024xf32>
    %c0_1 = arith.constant 0 : index
    %c0_2 = arith.constant 0 : index
    %1 = vector.load %arg2[%c0_1, %c0_2] : memref<1024x128xf32, #tpu.memory_space<vmem>>, vector<1024x128xf32>
    %cst = arith.constant dense<0.000000e+00> : vector<8x128xf32>
    %2 = tpu.matmul %0, %1, %cst {dimension_numbers = #tpu.dot_dimension_numbers<[1], [0], [0], [1], [0, 0, 1, 1], [], []>} : vector<8x1024xf32>, vector<1024x128xf32>, vector<8x128xf32> -> vector<8x128xf32>
    %c0_3 = arith.constant 0 : index
    %c0_4 = arith.constant 0 : index
    %3 = vector.load %arg3[%c0_3, %c0_4] : memref<1x128xf32, #tpu.memory_space<vmem>>, vector<1x128xf32>
    %4 = vector.broadcast %3 : vector<1x128xf32> to vector<8x128xf32>
    %5 = arith.addf %2, %4 : vector<8x128xf32>
    %6 = arith.negf %5 : vector<8x128xf32>
    %7 = math.exp %6 : vector<8x128xf32>
    %cst_5 = arith.constant 1.000000e+00 : f32
    %8 = vector.broadcast %cst_5 : f32 to vector<8x128xf32>
    %9 = arith.addf %8, %7 : vector<8x128xf32>
    %10 = arith.divf %8, %9 : vector<8x128xf32>
    %cst_6 = arith.constant 1.000000e+00 : f32
    %11 = vector.broadcast %cst_6 : f32 to vector<8x128xf32>
    %12 = arith.subf %11, %10 : vector<8x128xf32>
    %cst_7 = arith.constant 9.99999974E-6 : f32
    %13 = vector.broadcast %cst_7 : f32 to vector<8x128xf32>
    %14 = arith.addf %12, %13 : vector<8x128xf32>
    %cst_8 = arith.constant 0.999979972 : f32
    %15 = vector.broadcast %cst_8 : f32 to vector<8x128xf32>
    %16 = arith.mulf %14, %15 : vector<8x128xf32>
    %cst_9 = arith.constant 9.99999974E-6 : f32
    %17 = vector.broadcast %cst_9 : f32 to vector<8x128xf32>
    %18 = arith.addf %10, %17 : vector<8x128xf32>
    %cst_10 = arith.constant 0.999979972 : f32
    %19 = vector.broadcast %cst_10 : f32 to vector<8x128xf32>
    %20 = arith.mulf %18, %19 : vector<8x128xf32>
    %21 = math.log %16 : vector<8x128xf32>
    %22 = math.log %20 : vector<8x128xf32>
    %23 = tpu.iota {dimensions = array<i32: 1>} : vector<8x128xi32>
    %c5_i32 = arith.constant 5 : i32
    %24 = vector.broadcast %c5_i32 : i32 to vector<8x128xi32>
    %25 = arith.cmpi sge, %23, %24 : vector<8x128xi32>
    %c8_i32 = arith.constant 8 : i32
    %26 = vector.broadcast %c8_i32 : i32 to vector<8x128xi32>
    %27 = arith.cmpi sle, %23, %26 : vector<8x128xi32>
    %28 = arith.andi %25, %27 : vector<8x128xi1>
    %cst_11 = arith.constant 0.000000e+00 : f32
    %29 = vector.broadcast %cst_11 : f32 to vector<8x128xf32>
    %30 = arith.select %28, %21, %29 : vector<8x128xi1>, vector<8x128xf32>
    %cst_12 = arith.constant dense<0.000000e+00> : vector<8xf32>
    %31 = vector.multi_reduction <add>, %30, %cst_12 [1] : vector<8x128xf32> to vector<8xf32>
    %32 = vector.shape_cast %31 : vector<8xf32> to vector<8x1xf32>
    %33 = math.exp %32 : vector<8x1xf32>
    %cst_13 = arith.constant 1.000000e+00 : f32
    %34 = vector.broadcast %cst_13 : f32 to vector<8x1xf32>
    %35 = arith.subf %34, %33 : vector<8x1xf32>
    %36 = math.log %35 : vector<8x1xf32>
    %c21_i32 = arith.constant 21 : i32
    %37 = vector.broadcast %c21_i32 : i32 to vector<8x128xi32>
    %38 = arith.cmpi eq, %23, %37 : vector<8x128xi32>
    %39 = vector.shape_cast %32 : vector<8x1xf32> to vector<8x1xf32>
    %40 = vector.broadcast %39 : vector<8x1xf32> to vector<8x128xf32>
    %41 = arith.select %38, %40, %21 : vector<8x128xi1>, vector<8x128xf32>
    %c21_i32_14 = arith.constant 21 : i32
    %42 = vector.broadcast %c21_i32_14 : i32 to vector<8x128xi32>
    %43 = arith.cmpi eq, %23, %42 : vector<8x128xi32>
    %44 = vector.shape_cast %36 : vector<8x1xf32> to vector<8x1xf32>
    %45 = vector.broadcast %44 : vector<8x1xf32> to vector<8x128xf32>
    %46 = arith.select %43, %45, %22 : vector<8x128xi1>, vector<8x128xf32>
    %47 = tpu.concatenate %41, %46 in 1 : vector<8x128xf32>, vector<8x128xf32> -> vector<8x256xf32>
    %c0_15 = arith.constant 0 : index
    %c0_16 = arith.constant 0 : index
    %48 = vector.load %arg4[%c0_15, %c0_16] : memref<256x256xf32, #tpu.memory_space<vmem>>, vector<256x256xf32>
    %cst_17 = arith.constant dense<0.000000e+00> : vector<8x256xf32>
    %49 = tpu.matmul %47, %48, %cst_17 {dimension_numbers = #tpu.dot_dimension_numbers<[1], [0], [0], [1], [0, 0, 1, 1], [], []>} : vector<8x256xf32>, vector<256x256xf32>, vector<8x256xf32> -> vector<8x256xf32>
    %50 = math.exp %49 : vector<8x256xf32>
    %c0_18 = arith.constant 0 : index
    %c0_19 = arith.constant 0 : index
    %51 = vector.load %arg5[%c0_18, %c0_19] : memref<256x128xf32, #tpu.memory_space<vmem>>, vector<256x128xf32>
    %cst_20 = arith.constant dense<0.000000e+00> : vector<8x128xf32>
    %52 = tpu.matmul %50, %51, %cst_20 {dimension_numbers = #tpu.dot_dimension_numbers<[1], [0], [0], [1], [0, 0, 1, 1], [], []>} : vector<8x256xf32>, vector<256x128xf32>, vector<8x128xf32> -> vector<8x128xf32>
    %cst_21 = arith.constant 9.99999974E-6 : f32
    %53 = vector.broadcast %cst_21 : f32 to vector<8x128xf32>
    %54 = arith.addf %52, %53 : vector<8x128xf32>
    %cst_22 = arith.constant 0.999979972 : f32
    %55 = vector.broadcast %cst_22 : f32 to vector<8x128xf32>
    %56 = arith.mulf %54, %55 : vector<8x128xf32>
    %c0_23 = arith.constant 0 : index
    %c0_24 = arith.constant 0 : index
    %57 = vector.load %arg6[%c0_23, %c0_24] : memref<8x128xf32, #tpu.memory_space<vmem>>, vector<8x128xf32>
    tpu.vector_store %arg6[%c0_23, %c0_24], %56 {strides = array<i32>} : memref<8x128xf32, #tpu.memory_space<vmem>>, vector<8x128xf32>,
    return
  }
  func.func @transform_0(%arg0: i32) -> (i32, i32) {
    %c0_i32 = arith.constant 0 : i32
    %c0_i32_0 = arith.constant 0 : i32
    return %arg0, %c0_i32 : i32, i32
  }
  func.func @transform_1(%arg0: i32) -> (i32, i32) {
    %c0_i32 = arith.constant 0 : i32
    %c0_i32_0 = arith.constant 0 : i32
    %c0_i32_1 = arith.constant 0 : i32
    return %c0_i32, %c0_i32_0 : i32, i32
  }
  func.func @transform_2(%arg0: i32) -> (i32, i32) {
    %c0_i32 = arith.constant 0 : i32
    %c0_i32_0 = arith.constant 0 : i32
    %c0_i32_1 = arith.constant 0 : i32
    return %c0_i32, %c0_i32_0 : i32, i32
  }
  func.func @transform_3(%arg0: i32) -> (i32, i32) {
    %c0_i32 = arith.constant 0 : i32
    %c0_i32_0 = arith.constant 0 : i32
    %c0_i32_1 = arith.constant 0 : i32
    return %c0_i32, %c0_i32_0 : i32, i32
  }
  func.func @transform_4(%arg0: i32) -> (i32, i32) {
    %c0_i32 = arith.constant 0 : i32
    %c0_i32_0 = arith.constant 0 : i32
    %c0_i32_1 = arith.constant 0 : i32
    return %c0_i32, %c0_i32_0 : i32, i32
  }
  func.func @transform_5(%arg0: i32) -> (i32, i32) {
    %c0_i32 = arith.constant 0 : i32
    %c0_i32_0 = arith.constant 0 : i32
    return %arg0, %c0_i32 : i32, i32
  }
}

</mosaic_0001>

<llo_original>
// kernel: _dpl_launch.1
$region0: #{_dpl_launch.1}
  #allocation0 [shape = 'u32[]', space=smem, size = 0x4, offset = 0x4, fixed_abs, tag = 'smem constant byte address 0x4 - core index']
  #allocation1 [shape = 'u32[144,128]{1,0:T(1,128)}', space=vmem, size = 0x12000, scoped, tag = 'internal scratch']
  %s0 = inlined_call_operand.hbm [shape: f32[8,1024], index: 0, kind: input, shape index: {}]
  %s1 = inlined_call_operand.hbm [shape: f32[1024,128], index: 1, kind: input, shape index: {}]
  %s2 = inlined_call_operand.vmem [shape: f32[1,128], index: 2, kind: input, shape index: {}]
  %s3 = inlined_call_operand.hbm [shape: f32[256,256], index: 3, kind: input, shape index: {}]
  %s4 = inlined_call_operand.hbm [shape: f32[256,128], index: 4, kind: input, shape index: {}]
  %s5 = inlined_call_operand.hbm [shape: f32[8,128], index: 5, kind: output, shape index: {}]
  %s6 = sld [smem:[#allocation0]]
  $region46: #{_dpl_launch.1} parent=0
    _
  %s8 = ssub.s32 1, %s6
  %s9 = scalar_select 0, %s8, %s6
  $region1: #{_dpl_launch.1} parent=0
    #allocation2 [shape = 'u8[32768]{0}', space=vmem, size = 0x8000, scoped, tag = 'input window, operand 0, single buffered']
    #allocation3 [shape = 's32[1]{0}', space=sflag, size = 0x4, scoped, tag = 'scoped memory for _dpl_launch.1']
    #allocation4 [shape = 's32[1]{0}', space=sflag, size = 0x4, scoped, tag = 'scoped memory for _dpl_launch.1']
    #allocation5 [shape = 'u8[524288]{0}', space=vmem, size = 0x80000, scoped, tag = 'input window, operand 1, single buffered']
    #allocation6 [shape = 's32[1]{0}', space=sflag, size = 0x4, scoped, tag = 'scoped memory for _dpl_launch.1']
    #allocation7 [shape = 'u8[262144]{0}', space=vmem, size = 0x40000, scoped, tag = 'input window, operand 3, single buffered']
    #allocation8 [shape = 'u8[131072]{0}', space=vmem, size = 0x20000, scoped, tag = 'input window, operand 4, single buffered']
    #allocation9 [shape = 's32[1]{0}', space=sflag, size = 0x4, scoped, tag = 'scoped memory for _dpl_launch.1']
    #allocation10 [shape = 'u8[4096]{0}', space=vmem, size = 0x1000, scoped, tag = 'output window, operand 0, single buffered']
    %10 = vsyncpa [#allocation3], 0
    %11 = vsyncpa [#allocation6], 0
    %12 = vsyncpa [#allocation9], 0
    %13 = vsyncpa [#allocation4], 0
    // Predicated region
    $region2: #{_dpl_launch.1} parent=1 // pred_check
      _
    $region3: #{_dpl_launch.1} parent=1 // pred_check_branch
      %15 = sbr.rel (0) target = $region5
    $region4: #{_dpl_launch.1} parent=1 // pred_region
      %s17 = ssub.s32 1024, 1024
      %18 = vsyncadd [#allocation3], %s17
      %s20 = sshll.u32 [#allocation2], 4
      %s21 = int_to_ptr.vmem [resolvable:$true] %s20
      %23 = dma.hbm_to_vmem [thread:$0]  %s0, 1024, %s21, [#allocation3]
    $region5: #{_dpl_launch.1} parent=1 // pred_fallthru
      _
    // Predicated region
    $region6: #{_dpl_launch.1} parent=1 // pred_check
      _
    $region7: #{_dpl_launch.1} parent=1 // pred_check_branch
      %25 = sbr.rel (0) target = $region9
    $region8: #{_dpl_launch.1} parent=1 // pred_region
      %s27 = ssub.s32 16384, 16384
      %28 = vsyncadd [#allocation6], %s27
      %s29 = sshll.u32 [#allocation5], 4
      %s30 = int_to_ptr.vmem [resolvable:$true] %s29
      %35 = dma.hbm_to_vmem [thread:$0]  %s1, 16384, %s30, [#allocation6], 128, 128, 8
    $region9: #{_dpl_launch.1} parent=1 // pred_fallthru
      _
    // Predicated region
    $region10: #{_dpl_launch.1} parent=1 // pred_check
      _
    $region11: #{_dpl_launch.1} parent=1 // pred_check_branch
      %37 = sbr.rel (0) target = $region13
    $region12: #{_dpl_launch.1} parent=1 // pred_region
      _
    $region13: #{_dpl_launch.1} parent=1 // pred_fallthru
      _
    // Predicated region
    $region14: #{_dpl_launch.1} parent=1 // pred_check
      _
    $region15: #{_dpl_launch.1} parent=1 // pred_check_branch
      %39 = sbr.rel (0) target = $region17
    $region16: #{_dpl_launch.1} parent=1 // pred_region
      %s41 = ssub.s32 8192, 8192
      %42 = vsyncadd [#allocation6], %s41
      %s43 = sshll.u32 [#allocation7], 4
      %s44 = int_to_ptr.vmem [resolvable:$true] %s43
      %49 = dma.hbm_to_vmem [thread:$0]  %s3, 8192, %s44, [#allocation6], 256, 256, 16
    $region17: #{_dpl_launch.1} parent=1 // pred_fallthru
      _
    // Predicated region
    $region18: #{_dpl_launch.1} parent=1 // pred_check
      _
    $region19: #{_dpl_launch.1} parent=1 // pred_check_branch
      %51 = sbr.rel (0) target = $region21
    $region20: #{_dpl_launch.1} parent=1 // pred_region
      %s53 = ssub.s32 4096, 4096
      %54 = vsyncadd [#allocation9], %s53
      %s55 = sshll.u32 [#allocation8], 4
      %s56 = int_to_ptr.vmem [resolvable:$true] %s55
      %61 = dma.hbm_to_vmem [thread:$0]  %s4, 4096, %s56, [#allocation9], 128, 128, 8
    $region21: #{_dpl_launch.1} parent=1 // pred_fallthru
      _
    // Predicated region
    $region22: #{_dpl_launch.1} parent=1 // pred_check
      _
    $region23: #{_dpl_launch.1} parent=1 // pred_check_branch
      %63 = sbr.rel (0) target = $region25
    $region24: #{_dpl_launch.1} parent=1 // pred_region
      %64 = dma.done [#allocation3], 1024
    $region25: #{_dpl_launch.1} parent=1 // pred_fallthru
      _
    // Predicated region
    $region26: #{_dpl_launch.1} parent=1 // pred_check
      _
    $region27: #{_dpl_launch.1} parent=1 // pred_check_branch
      %66 = sbr.rel (0) target = $region29
    $region28: #{_dpl_launch.1} parent=1 // pred_region
      %67 = dma.done [#allocation6], 16384
    $region29: #{_dpl_launch.1} parent=1 // pred_fallthru
      _
    // Predicated region
    $region30: #{_dpl_launch.1} parent=1 // pred_check
      _
    $region31: #{_dpl_launch.1} parent=1 // pred_check_branch
      %69 = sbr.rel (0) target = $region33
    $region32: #{_dpl_launch.1} parent=1 // pred_region
      %70 = dma.done [#allocation6], 8192
    $region33: #{_dpl_launch.1} parent=1 // pred_fallthru
      _
    // Predicated region
    $region34: #{_dpl_launch.1} parent=1 // pred_check
      _
    $region35: #{_dpl_launch.1} parent=1 // pred_check_branch
      %72 = sbr.rel (0) target = $region37
    $region36: #{_dpl_launch.1} parent=1 // pred_region
      %73 = dma.done [#allocation9], 4096
    $region37: #{_dpl_launch.1} parent=1 // pred_fallthru
      _
    %v74 = vld [vmem:[#allocation2] sm:$0xff]
    %v75 = vld [vmem:[#allocation2 + $0x8] sm:$0xff]
    %v76 = vld [vmem:[#allocation2 + $0x10] sm:$0xff]
    %v77 = vld [vmem:[#allocation2 + $0x18] sm:$0xff]
    %v78 = vld [vmem:[#allocation2 + $0x20] sm:$0xff]
    %v79 = vld [vmem:[#allocation2 + $0x28] sm:$0xff]
    %v80 = vld [vmem:[#allocation2 + $0x30] sm:$0xff]
    %v81 = vld [vmem:[#allocation2 + $0x38] sm:$0xff]
    %v82 = vld [vmem:[#allocation5] sm:$0xff]
    %v83 = vld [vmem:[#allocation5 + $0x8] sm:$0xff]
    %v84 = vld [vmem:[#allocation5 + $0x10] sm:$0xff]
    %v85 = vld [vmem:[#allocation5 + $0x18] sm:$0xff]
    %v86 = vld [vmem:[#allocation5 + $0x20] sm:$0xff]
    %v87 = vld [vmem:[#allocation5 + $0x28] sm:$0xff]
    %v88 = vld [vmem:[#allocation5 + $0x30] sm:$0xff]
    %v89 = vld [vmem:[#allocation5 + $0x38] sm:$0xff]
    %v90 = vld [vmem:[#allocation5 + $0x40] sm:$0xff]
    %v91 = vld [vmem:[#allocation5 + $0x48] sm:$0xff]
    %v92 = vld [vmem:[#allocation5 + $0x50] sm:$0xff]
    %v93 = vld [vmem:[#allocation5 + $0x58] sm:$0xff]
    %v94 = vld [vmem:[#allocation5 + $0x60] sm:$0xff]
    %v95 = vld [vmem:[#allocation5 + $0x68] sm:$0xff]
    %v96 = vld [vmem:[#allocation5 + $0x70] sm:$0xff]
    %v97 = vld [vmem:[#allocation5 + $0x78] sm:$0xff]
    %v98 = vld [vmem:[#allocation5 + $0x80] sm:$0xff]
    %v99 = vld [vmem:[#allocation5 + $0x88] sm:$0xff]
    %v100 = vld [vmem:[#allocation5 + $0x90] sm:$0xff]
    %v101 = vld [vmem:[#allocation5 + $0x98] sm:$0xff]
    %v102 = vld [vmem:[#allocation5 + $0xa0] sm:$0xff]
    %v103 = vld [vmem:[#allocation5 + $0xa8] sm:$0xff]
    %v104 = vld [vmem:[#allocation5 + $0xb0] sm:$0xff]
    %v105 = vld [vmem:[#allocation5 + $0xb8] sm:$0xff]
    %v106 = vld [vmem:[#allocation5 + $0xc0] sm:$0xff]
    %v107 = vld [vmem:[#allocation5 + $0xc8] sm:$0xff]
    %v108 = vld [vmem:[#allocation5 + $0xd0] sm:$0xff]
    %v109 = vld [vmem:[#allocation5 + $0xd8] sm:$0xff]
    %v110 = vld [vmem:[#allocation5 + $0xe0] sm:$0xff]
    %v111 = vld [vmem:[#allocation5 + $0xe8] sm:$0xff]
    %v112 = vld [vmem:[#allocation5 + $0xf0] sm:$0xff]
    %v113 = vld [vmem:[#allocation5 + $0xf8] sm:$0xff]
    %v114 = vld [vmem:[#allocation5 + $0x100] sm:$0xff]
    %v115 = vld [vmem:[#allocation5 + $0x108] sm:$0xff]
    %v116 = vld [vmem:[#allocation5 + $0x110] sm:$0xff]
    %v117 = vld [vmem:[#allocation5 + $0x118] sm:$0xff]
    %v118 = vld [vmem:[#allocation5 + $0x120] sm:$0xff]
    %v119 = vld [vmem:[#allocation5 + $0x128] sm:$0xff]
    %v120 = vld [vmem:[#allocation5 + $0x130] sm:$0xff]
    %v121 = vld [vmem:[#allocation5 + $0x138] sm:$0xff]
    %v122 = vld [vmem:[#allocation5 + $0x140] sm:$0xff]
    %v123 = vld [vmem:[#allocation5 + $0x148] sm:$0xff]
    %v124 = vld [vmem:[#allocation5 + $0x150] sm:$0xff]
    %v125 = vld [vmem:[#allocation5 + $0x158] sm:$0xff]
    %v126 = vld [vmem:[#allocation5 + $0x160] sm:$0xff]
    %v127 = vld [vmem:[#allocation5 + $0x168] sm:$0xff]
    %v128 = vld [vmem:[#allocation5 + $0x170] sm:$0xff]
    %v129 = vld [vmem:[#allocation5 + $0x178] sm:$0xff]
    %v130 = vld [vmem:[#allocation5 + $0x180] sm:$0xff]
    %v131 = vld [vmem:[#allocation5 + $0x188] sm:$0xff]
    %v132 = vld [vmem:[#allocation5 + $0x190] sm:$0xff]
    %v133 = vld [vmem:[#allocation5 + $0x198] sm:$0xff]
    %v134 = vld [vmem:[#allocation5 + $0x1a0] sm:$0xff]
    %v135 = vld [vmem:[#allocation5 + $0x1a8] sm:$0xff]
    %v136 = vld [vmem:[#allocation5 + $0x1b0] sm:$0xff]
    %v137 = vld [vmem:[#allocation5 + $0x1b8] sm:$0xff]
    %v138 = vld [vmem:[#allocation5 + $0x1c0] sm:$0xff]
    %v139 = vld [vmem:[#allocation5 + $0x1c8] sm:$0xff]
    %v140 = vld [vmem:[#allocation5 + $0x1d0] sm:$0xff]
    %v141 = vld [vmem:[#allocation5 + $0x1d8] sm:$0xff]
    %v142 = vld [vmem:[#allocation5 + $0x1e0] sm:$0xff]
    %v143 = vld [vmem:[#allocation5 + $0x1e8] sm:$0xff]
    %v144 = vld [vmem:[#allocation5 + $0x1f0] sm:$0xff]
    %v145 = vld [vmem:[#allocation5 + $0x1f8] sm:$0xff]
    %v146 = vld [vmem:[#allocation5 + $0x200] sm:$0xff]
    %v147 = vld [vmem:[#allocation5 + $0x208] sm:$0xff]
    %v148 = vld [vmem:[#allocation5 + $0x210] sm:$0xff]
    %v149 = vld [vmem:[#allocation5 + $0x218] sm:$0xff]
    %v150 = vld [vmem:[#allocation5 + $0x220] sm:$0xff]
    %v151 = vld [vmem:[#allocation5 + $0x228] sm:$0xff]
    %v152 = vld [vmem:[#allocation5 + $0x230] sm:$0xff]
    %v153 = vld [vmem:[#allocation5 + $0x238] sm:$0xff]
    %v154 = vld [vmem:[#allocation5 + $0x240] sm:$0xff]
    %v155 = vld [vmem:[#allocation5 + $0x248] sm:$0xff]
    %v156 = vld [vmem:[#allocation5 + $0x250] sm:$0xff]
    %v157 = vld [vmem:[#allocation5 + $0x258] sm:$0xff]
    %v158 = vld [vmem:[#allocation5 + $0x260] sm:$0xff]
    %v159 = vld [vmem:[#allocation5 + $0x268] sm:$0xff]
    %v160 = vld [vmem:[#allocation5 + $0x270] sm:$0xff]
    %v161 = vld [vmem:[#allocation5 + $0x278] sm:$0xff]
    %v162 = vld [vmem:[#allocation5 + $0x280] sm:$0xff]
    %v163 = vld [vmem:[#allocation5 + $0x288] sm:$0xff]
    %v164 = vld [vmem:[#allocation5 + $0x290] sm:$0xff]
    %v165 = vld [vmem:[#allocation5 + $0x298] sm:$0xff]
    %v166 = vld [vmem:[#allocation5 + $0x2a0] sm:$0xff]
    %v167 = vld [vmem:[#allocation5 + $0x2a8] sm:$0xff]
    %v168 = vld [vmem:[#allocation5 + $0x2b0] sm:$0xff]
    %v169 = vld [vmem:[#allocation5 + $0x2b8] sm:$0xff]
    %v170 = vld [vmem:[#allocation5 + $0x2c0] sm:$0xff]
    %v171 = vld [vmem:[#allocation5 + $0x2c8] sm:$0xff]
    %v172 = vld [vmem:[#allocation5 + $0x2d0] sm:$0xff]
    %v173 = vld [vmem:[#allocation5 + $0x2d8] sm:$0xff]
    %v174 = vld [vmem:[#allocation5 + $0x2e0] sm:$0xff]
    %v175 = vld [vmem:[#allocation5 + $0x2e8] sm:$0xff]
    %v176 = vld [vmem:[#allocation5 + $0x2f0] sm:$0xff]
    %v177 = vld [vmem:[#allocation5 + $0x2f8] sm:$0xff]
    %v178 = vld [vmem:[#allocation5 + $0x300] sm:$0xff]
    %v179 = vld [vmem:[#allocation5 + $0x308] sm:$0xff]
    %v180 = vld [vmem:[#allocation5 + $0x310] sm:$0xff]
    %v181 = vld [vmem:[#allocation5 + $0x318] sm:$0xff]
    %v182 = vld [vmem:[#allocation5 + $0x320] sm:$0xff]
    %v183 = vld [vmem:[#allocation5 + $0x328] sm:$0xff]
    %v184 = vld [vmem:[#allocation5 + $0x330] sm:$0xff]
    %v185 = vld [vmem:[#allocation5 + $0x338] sm:$0xff]
    %v186 = vld [vmem:[#allocation5 + $0x340] sm:$0xff]
    %v187 = vld [vmem:[#allocation5 + $0x348] sm:$0xff]
    %v188 = vld [vmem:[#allocation5 + $0x350] sm:$0xff]
    %v189 = vld [vmem:[#allocation5 + $0x358] sm:$0xff]
    %v190 = vld [vmem:[#allocation5 + $0x360] sm:$0xff]
    %v191 = vld [vmem:[#allocation5 + $0x368] sm:$0xff]
    %v192 = vld [vmem:[#allocation5 + $0x370] sm:$0xff]
    %v193 = vld [vmem:[#allocation5 + $0x378] sm:$0xff]
    %v194 = vld [vmem:[#allocation5 + $0x380] sm:$0xff]
    %v195 = vld [vmem:[#allocation5 + $0x388] sm:$0xff]
    %v196 = vld [vmem:[#allocation5 + $0x390] sm:$0xff]
    %v197 = vld [vmem:[#allocation5 + $0x398] sm:$0xff]
    %v198 = vld [vmem:[#allocation5 + $0x3a0] sm:$0xff]
    %v199 = vld [vmem:[#allocation5 + $0x3a8] sm:$0xff]
    %v200 = vld [vmem:[#allocation5 + $0x3b0] sm:$0xff]
    %v201 = vld [vmem:[#allocation5 + $0x3b8] sm:$0xff]
    %v202 = vld [vmem:[#allocation5 + $0x3c0] sm:$0xff]
    %v203 = vld [vmem:[#allocation5 + $0x3c8] sm:$0xff]
    %v204 = vld [vmem:[#allocation5 + $0x3d0] sm:$0xff]
    %v205 = vld [vmem:[#allocation5 + $0x3d8] sm:$0xff]
    %v206 = vld [vmem:[#allocation5 + $0x3e0] sm:$0xff]
    %v207 = vld [vmem:[#allocation5 + $0x3e8] sm:$0xff]
    %v208 = vld [vmem:[#allocation5 + $0x3f0] sm:$0xff]
    %v209 = vld [vmem:[#allocation5 + $0x3f8] sm:$0xff]
    %v210 = vld [vmem:[%s2] sm:$0x1]
    %v212 = vlaneseq
    %v213 = vshrl.u32 %v212, 7
    %v214 = vsub.s32 0, %v213
    %v215 = vrot.slane %v210, %v214
    %217 = vmatprep.subr.mxu0 0.0
    %218 = vmatpush1.msra.mxu0 %v82
    %219 = vmatprep.subr.mxu0 0.0
    %220 = vmatpush1.msra.mxu0 %v83
    %221 = vmatprep.subr.mxu0 0.0
    %222 = vmatpush1.msra.mxu0 %v84
    %223 = vmatprep.subr.mxu0 0.0
    %224 = vmatpush1.msra.mxu0 %v85
    %225 = vmatprep.subr.mxu0 0.0
    %226 = vmatpush1.msra.mxu0 %v86
    %227 = vmatprep.subr.mxu0 0.0
    %228 = vmatpush1.msra.mxu0 %v87
    %229 = vmatprep.subr.mxu0 0.0
    %230 = vmatpush1.msra.mxu0 %v88
    %231 = vmatprep.subr.mxu0 0.0
    %232 = vmatpush1.msra.mxu0 %v89
    %233 = vmatprep.subr.mxu0 0.0
    %234 = vmatpush1.msra.mxu0 %v90
    %235 = vmatprep.subr.mxu0 0.0
    %236 = vmatpush1.msra.mxu0 %v91
    %237 = vmatprep.subr.mxu0 0.0
    %238 = vmatpush1.msra.mxu0 %v92
    %239 = vmatprep.subr.mxu0 0.0
    %240 = vmatpush1.msra.mxu0 %v93
    %241 = vmatprep.subr.mxu0 0.0
    %242 = vmatpush1.msra.mxu0 %v94
    %243 = vmatprep.subr.mxu0 0.0
    %244 = vmatpush1.msra.mxu0 %v95
    %245 = vmatprep.subr.mxu0 0.0
    %246 = vmatpush1.msra.mxu0 %v96
    %247 = vmatprep.subr.mxu0 0.0
    %248 = vmatpush1.msra.mxu0 %v97
    %249 = vmatprep.subr.mxu0 0.0
    %250 = vmatpush1.msra.mxu0 %v98
    %251 = vmatprep.subr.mxu0 0.0
    %252 = vmatpush1.msra.mxu0 %v99
    %253 = vmatprep.subr.mxu0 0.0
    %254 = vmatpush1.msra.mxu0 %v100
    %255 = vmatprep.subr.mxu0 0.0
    %256 = vmatpush1.msra.mxu0 %v101
    %257 = vmatprep.subr.mxu0 0.0
    %258 = vmatpush1.msra.mxu0 %v102
    %259 = vmatprep.subr.mxu0 0.0
    %260 = vmatpush1.msra.mxu0 %v103
    %261 = vmatprep.subr.mxu0 0.0
    %262 = vmatpush1.msra.mxu0 %v104
    %263 = vmatprep.subr.mxu0 0.0
    %264 = vmatpush1.msra.mxu0 %v105
    %265 = vmatprep.subr.mxu0 0.0
    %266 = vmatpush1.msra.mxu0 %v106
    %267 = vmatprep.subr.mxu0 0.0
    %268 = vmatpush1.msra.mxu0 %v107
    %269 = vmatprep.subr.mxu0 0.0
    %270 = vmatpush1.msra.mxu0 %v108
    %271 = vmatprep.subr.mxu0 0.0
    %272 = vmatpush1.msra.mxu0 %v109
    %273 = vmatprep.subr.mxu0 0.0
    %274 = vmatpush1.msra.mxu0 %v110
    %275 = vmatprep.subr.mxu0 0.0
    %276 = vmatpush1.msra.mxu0 %v111
    %277 = vmatprep.subr.mxu0 0.0
    %278 = vmatpush1.msra.mxu0 %v112
    %279 = vmatprep.subr.mxu0 0.0
    %280 = vmatpush1.msra.mxu0 %v113
    %281 = vmatprep.mubr.f32.mxu0 %v75
    %282 = vmatmul.mubr.f32.gmra.mrb[0].mxu0 %v74
    %v283 = vpop.f32.mrb[0].mxu0
    %v284 = vadd.f32 %v215, %v283
    %v285 = vpop.f32.mrb[0].mxu0
    %286 = vdwg.mxu0
    %287 = vmatprep.subr.mxu0 0.0
    %288 = vmatpush1.msra.mxu0 %v114
    %289 = vmatprep.subr.mxu0 0.0
    %290 = vmatpush1.msra.mxu0 %v115
    %291 = vmatprep.subr.mxu0 0.0
    %292 = vmatpush1.msra.mxu0 %v116
    %293 = vmatprep.subr.mxu0 0.0
    %294 = vmatpush1.msra.mxu0 %v117
    %295 = vmatprep.subr.mxu0 0.0
    %296 = vmatpush1.msra.mxu0 %v118
    %297 = vmatprep.subr.mxu0 0.0
    %298 = vmatpush1.msra.mxu0 %v119
    %299 = vmatprep.subr.mxu0 0.0
    %300 = vmatpush1.msra.mxu0 %v120
    %301 = vmatprep.subr.mxu0 0.0
    %302 = vmatpush1.msra.mxu0 %v121
    %303 = vmatprep.subr.mxu0 0.0
    %304 = vmatpush1.msra.mxu0 %v122
    %305 = vmatprep.subr.mxu0 0.0
    %306 = vmatpush1.msra.mxu0 %v123
    %307 = vmatprep.subr.mxu0 0.0
    %308 = vmatpush1.msra.mxu0 %v124
    %309 = vmatprep.subr.mxu0 0.0
    %310 = vmatpush1.msra.mxu0 %v125
    %311 = vmatprep.subr.mxu0 0.0
    %312 = vmatpush1.msra.mxu0 %v126
    %313 = vmatprep.subr.mxu0 0.0
    %314 = vmatpush1.msra.mxu0 %v127
    %315 = vmatprep.subr.mxu0 0.0
    %316 = vmatpush1.msra.mxu0 %v128
    %317 = vmatprep.subr.mxu0 0.0
    %318 = vmatpush1.msra.mxu0 %v129
    %319 = vmatprep.subr.mxu0 0.0
    %320 = vmatpush1.msra.mxu0 %v130
    %321 = vmatprep.subr.mxu0 0.0
    %322 = vmatpush1.msra.mxu0 %v131
    %323 = vmatprep.subr.mxu0 0.0
    %324 = vmatpush1.msra.mxu0 %v132
    %325 = vmatprep.subr.mxu0 0.0
    %326 = vmatpush1.msra.mxu0 %v133
    %327 = vmatprep.subr.mxu0 0.0
    %328 = vmatpush1.msra.mxu0 %v134
    %329 = vmatprep.subr.mxu0 0.0
    %330 = vmatpush1.msra.mxu0 %v135
    %331 = vmatprep.subr.mxu0 0.0
    %332 = vmatpush1.msra.mxu0 %v136
    %333 = vmatprep.subr.mxu0 0.0
    %334 = vmatpush1.msra.mxu0 %v137
    %335 = vmatprep.subr.mxu0 0.0
    %336 = vmatpush1.msra.mxu0 %v138
    %337 = vmatprep.subr.mxu0 0.0
    %338 = vmatpush1.msra.mxu0 %v139
    %339 = vmatprep.subr.mxu0 0.0
    %340 = vmatpush1.msra.mxu0 %v140
    %341 = vmatprep.subr.mxu0 0.0
    %342 = vmatpush1.msra.mxu0 %v141
    %343 = vmatprep.subr.mxu0 0.0
    %344 = vmatpush1.msra.mxu0 %v142
    %345 = vmatprep.subr.mxu0 0.0
    %346 = vmatpush1.msra.mxu0 %v143
    %347 = vmatprep.subr.mxu0 0.0
    %348 = vmatpush1.msra.mxu0 %v144
    %349 = vmatprep.subr.mxu0 0.0
    %350 = vmatpush1.msra.mxu0 %v145
    %351 = vmatprep.mubr.f32.mxu0 %v77
    %352 = vmatmul.mubr.f32.gmra.mrb[0].mxu0 %v76
    %v353 = vpop.f32.mrb[0].mxu0
    %v354 = vadd.f32 %v284, %v353
    %v355 = vpop.f32.mrb[0].mxu0
    %356 = vdwg.mxu0
    %357 = vmatprep.subr.mxu0 0.0
    %358 = vmatpush1.msra.mxu0 %v146
    %359 = vmatprep.subr.mxu0 0.0
    %360 = vmatpush1.msra.mxu0 %v147
    %361 = vmatprep.subr.mxu0 0.0
    %362 = vmatpush1.msra.mxu0 %v148
    %363 = vmatprep.subr.mxu0 0.0
    %364 = vmatpush1.msra.mxu0 %v149
    %365 = vmatprep.subr.mxu0 0.0
    %366 = vmatpush1.msra.mxu0 %v150
    %367 = vmatprep.subr.mxu0 0.0
    %368 = vmatpush1.msra.mxu0 %v151
    %369 = vmatprep.subr.mxu0 0.0
    %370 = vmatpush1.msra.mxu0 %v152
    %371 = vmatprep.subr.mxu0 0.0
    %372 = vmatpush1.msra.mxu0 %v153
    %373 = vmatprep.subr.mxu0 0.0
    %374 = vmatpush1.msra.mxu0 %v154
    %375 = vmatprep.subr.mxu0 0.0
    %376 = vmatpush1.msra.mxu0 %v155
    %377 = vmatprep.subr.mxu0 0.0
    %378 = vmatpush1.msra.mxu0 %v156
    %379 = vmatprep.subr.mxu0 0.0
    %380 = vmatpush1.msra.mxu0 %v157
    %381 = vmatprep.subr.mxu0 0.0
    %382 = vmatpush1.msra.mxu0 %v158
    %383 = vmatprep.subr.mxu0 0.0
    %384 = vmatpush1.msra.mxu0 %v159
    %385 = vmatprep.subr.mxu0 0.0
    %386 = vmatpush1.msra.mxu0 %v160
    %387 = vmatprep.subr.mxu0 0.0
    %388 = vmatpush1.msra.mxu0 %v161
    %389 = vmatprep.subr.mxu0 0.0
    %390 = vmatpush1.msra.mxu0 %v162
    %391 = vmatprep.subr.mxu0 0.0
    %392 = vmatpush1.msra.mxu0 %v163
    %393 = vmatprep.subr.mxu0 0.0
    %394 = vmatpush1.msra.mxu0 %v164
    %395 = vmatprep.subr.mxu0 0.0
    %396 = vmatpush1.msra.mxu0 %v165
    %397 = vmatprep.subr.mxu0 0.0
    %398 = vmatpush1.msra.mxu0 %v166
    %399 = vmatprep.subr.mxu0 0.0
    %400 = vmatpush1.msra.mxu0 %v167
    %401 = vmatprep.subr.mxu0 0.0
    %402 = vmatpush1.msra.mxu0 %v168
    %403 = vmatprep.subr.mxu0 0.0
    %404 = vmatpush1.msra.mxu0 %v169
    %405 = vmatprep.subr.mxu0 0.0
    %406 = vmatpush1.msra.mxu0 %v170
    %407 = vmatprep.subr.mxu0 0.0
    %408 = vmatpush1.msra.mxu0 %v171
    %409 = vmatprep.subr.mxu0 0.0
    %410 = vmatpush1.msra.mxu0 %v172
    %411 = vmatprep.subr.mxu0 0.0
    %412 = vmatpush1.msra.mxu0 %v173
    %413 = vmatprep.subr.mxu0 0.0
    %414 = vmatpush1.msra.mxu0 %v174
    %415 = vmatprep.subr.mxu0 0.0
    %416 = vmatpush1.msra.mxu0 %v175
    %417 = vmatprep.subr.mxu0 0.0
    %418 = vmatpush1.msra.mxu0 %v176
    %419 = vmatprep.subr.mxu0 0.0
    %420 = vmatpush1.msra.mxu0 %v177
    %421 = vmatprep.mubr.f32.mxu0 %v79
    %422 = vmatmul.mubr.f32.gmra.mrb[0].mxu0 %v78
    %v423 = vpop.f32.mrb[0].mxu0
    %v424 = vadd.f32 %v354, %v423
    %v425 = vpop.f32.mrb[0].mxu0
    %426 = vdwg.mxu0
    %427 = vmatprep.subr.mxu0 0.0
    %428 = vmatpush1.msra.mxu0 %v178
    %429 = vmatprep.subr.mxu0 0.0
    %430 = vmatpush1.msra.mxu0 %v179
    %431 = vmatprep.subr.mxu0 0.0
    %432 = vmatpush1.msra.mxu0 %v180
    %433 = vmatprep.subr.mxu0 0.0
    %434 = vmatpush1.msra.mxu0 %v181
    %435 = vmatprep.subr.mxu0 0.0
    %436 = vmatpush1.msra.mxu0 %v182
    %437 = vmatprep.subr.mxu0 0.0
    %438 = vmatpush1.msra.mxu0 %v183
    %439 = vmatprep.subr.mxu0 0.0
    %440 = vmatpush1.msra.mxu0 %v184
    %441 = vmatprep.subr.mxu0 0.0
    %442 = vmatpush1.msra.mxu0 %v185
    %443 = vmatprep.subr.mxu0 0.0
    %444 = vmatpush1.msra.mxu0 %v186
    %445 = vmatprep.subr.mxu0 0.0
    %446 = vmatpush1.msra.mxu0 %v187
    %447 = vmatprep.subr.mxu0 0.0
    %448 = vmatpush1.msra.mxu0 %v188
    %449 = vmatprep.subr.mxu0 0.0
    %450 = vmatpush1.msra.mxu0 %v189
    %451 = vmatprep.subr.mxu0 0.0
    %452 = vmatpush1.msra.mxu0 %v190
    %453 = vmatprep.subr.mxu0 0.0
    %454 = vmatpush1.msra.mxu0 %v191
    %455 = vmatprep.subr.mxu0 0.0
    %456 = vmatpush1.msra.mxu0 %v192
    %457 = vmatprep.subr.mxu0 0.0
    %458 = vmatpush1.msra.mxu0 %v193
    %459 = vmatprep.subr.mxu0 0.0
    %460 = vmatpush1.msra.mxu0 %v194
    %461 = vmatprep.subr.mxu0 0.0
    %462 = vmatpush1.msra.mxu0 %v195
    %463 = vmatprep.subr.mxu0 0.0
    %464 = vmatpush1.msra.mxu0 %v196
    %465 = vmatprep.subr.mxu0 0.0
    %466 = vmatpush1.msra.mxu0 %v197
    %467 = vmatprep.subr.mxu0 0.0
    %468 = vmatpush1.msra.mxu0 %v198
    %469 = vmatprep.subr.mxu0 0.0
    %470 = vmatpush1.msra.mxu0 %v199
    %471 = vmatprep.subr.mxu0 0.0
    %472 = vmatpush1.msra.mxu0 %v200
    %473 = vmatprep.subr.mxu0 0.0
    %474 = vmatpush1.msra.mxu0 %v201
    %475 = vmatprep.subr.mxu0 0.0
    %476 = vmatpush1.msra.mxu0 %v202
    %477 = vmatprep.subr.mxu0 0.0
    %478 = vmatpush1.msra.mxu0 %v203
    %479 = vmatprep.subr.mxu0 0.0
    %480 = vmatpush1.msra.mxu0 %v204
    %481 = vmatprep.subr.mxu0 0.0
    %482 = vmatpush1.msra.mxu0 %v205
    %483 = vmatprep.subr.mxu0 0.0
    %484 = vmatpush1.msra.mxu0 %v206
    %485 = vmatprep.subr.mxu0 0.0
    %486 = vmatpush1.msra.mxu0 %v207
    %487 = vmatprep.subr.mxu0 0.0
    %488 = vmatpush1.msra.mxu0 %v208
    %489 = vmatprep.subr.mxu0 0.0
    %490 = vmatpush1.msra.mxu0 %v209
    %491 = vmatprep.mubr.f32.mxu0 %v81
    %492 = vmatmul.mubr.f32.gmra.mrb[0].mxu0 %v80
    %v493 = vpop.f32.mrb[0].mxu0
    %v494 = vadd.f32 %v424, %v493
    %v495 = vpop.f32.mrb[0].mxu0
    %496 = vdwg.mxu0
    %v497 = vxor.u32 %v494, 2147483648
    %v498 = vmul.f32 %v497, 1.442695
    %v499 = vpow.pop %v498
    %v500 = vadd.f32 %v499, 1.0
    %v501 = vrcp.pop %v500
    %v502 = vmul.f32 1.0, %v501
    %v503 = vsub.f32 1.0, %v502
    %v504 = vadd.f32 %v503, 1e-05
    %v505 = vmul.f32 %v504, 0.99998
    %v506 = vadd.f32 %v502, 1e-05
    %v507 = vmul.f32 %v506, 0.99998
    %v508 = vlog2.pop %v505
    %v509 = vmul.f32 %v508, 0.6931472
    %v510 = vlog2.pop %v507
    %v511 = vmul.f32 %v510, 0.6931472
    %v512 = vlaneseq
    %v513 = vand.u32 %v512, 127
    %vm514 = vcmp.ge.s32.totalorder %v513, 5
    %vm515 = vcmp.le.s32.totalorder %v513, 8
    %vm516 = vmand %vm514, %vm515
    %v517 = vsel %vm516, %v509, 0.0
    %518 = vadd.xlane.f32.xlu0 %v517
    %v519 = vpop.xlane.xlu0 %518
    %v520 = vmul.f32 %v519, 1.442695
    %v521 = vpow.pop %v520
    %v522 = vsub.f32 1.0, %v521
    %v523 = vlog2.pop %v522
    %v524 = vmul.f32 %v523, 0.6931472
    %vm525 = vcmp.eq.s32.totalorder %v513, 21
    %v526 = vsel %vm525, %v519, %v509
    %v527 = vsel %vm525, %v524, %v511
    %v528 = vld [vmem:[#allocation7] sm:$0xff]
    %v529 = vld [vmem:[#allocation7 + $0x8] sm:$0xff]
    %v530 = vld [vmem:[#allocation7 + $0x10] sm:$0xff]
    %v531 = vld [vmem:[#allocation7 + $0x18] sm:$0xff]
    %v532 = vld [vmem:[#allocation7 + $0x20] sm:$0xff]
    %v533 = vld [vmem:[#allocation7 + $0x28] sm:$0xff]
    %v534 = vld [vmem:[#allocation7 + $0x30] sm:$0xff]
    %v535 = vld [vmem:[#allocation7 + $0x38] sm:$0xff]
    %v536 = vld [vmem:[#allocation7 + $0x40] sm:$0xff]
    %v537 = vld [vmem:[#allocation7 + $0x48] sm:$0xff]
    %v538 = vld [vmem:[#allocation7 + $0x50] sm:$0xff]
    %v539 = vld [vmem:[#allocation7 + $0x58] sm:$0xff]
    %v540 = vld [vmem:[#allocation7 + $0x60] sm:$0xff]
    %v541 = vld [vmem:[#allocation7 + $0x68] sm:$0xff]
    %v542 = vld [vmem:[#allocation7 + $0x70] sm:$0xff]
    %v543 = vld [vmem:[#allocation7 + $0x78] sm:$0xff]
    %v544 = vld [vmem:[#allocation7 + $0x80] sm:$0xff]
    %v545 = vld [vmem:[#allocation7 + $0x88] sm:$0xff]
    %v546 = vld [vmem:[#allocation7 + $0x90] sm:$0xff]
    %v547 = vld [vmem:[#allocation7 + $0x98] sm:$0xff]
    %v548 = vld [vmem:[#allocation7 + $0xa0] sm:$0xff]
    %v549 = vld [vmem:[#allocation7 + $0xa8] sm:$0xff]
    %v550 = vld [vmem:[#allocation7 + $0xb0] sm:$0xff]
    %v551 = vld [vmem:[#allocation7 + $0xb8] sm:$0xff]
    %v552 = vld [vmem:[#allocation7 + $0xc0] sm:$0xff]
    %v553 = vld [vmem:[#allocation7 + $0xc8] sm:$0xff]
    %v554 = vld [vmem:[#allocation7 + $0xd0] sm:$0xff]
    %v555 = vld [vmem:[#allocation7 + $0xd8] sm:$0xff]
    %v556 = vld [vmem:[#allocation7 + $0xe0] sm:$0xff]
    %v557 = vld [vmem:[#allocation7 + $0xe8] sm:$0xff]
    %v558 = vld [vmem:[#allocation7 + $0xf0] sm:$0xff]
    %v559 = vld [vmem:[#allocation7 + $0xf8] sm:$0xff]
    %v560 = vld [vmem:[#allocation7 + $0x100] sm:$0xff]
    %v561 = vld [vmem:[#allocation7 + $0x108] sm:$0xff]
    %v562 = vld [vmem:[#allocation7 + $0x110] sm:$0xff]
    %v563 = vld [vmem:[#allocation7 + $0x118] sm:$0xff]
    %v564 = vld [vmem:[#allocation7 + $0x120] sm:$0xff]
    %v565 = vld [vmem:[#allocation7 + $0x128] sm:$0xff]
    %v566 = vld [vmem:[#allocation7 + $0x130] sm:$0xff]
    %v567 = vld [vmem:[#allocation7 + $0x138] sm:$0xff]
    %v568 = vld [vmem:[#allocation7 + $0x140] sm:$0xff]
    %v569 = vld [vmem:[#allocation7 + $0x148] sm:$0xff]
    %v570 = vld [vmem:[#allocation7 + $0x150] sm:$0xff]
    %v571 = vld [vmem:[#allocation7 + $0x158] sm:$0xff]
    %v572 = vld [vmem:[#allocation7 + $0x160] sm:$0xff]
    %v573 = vld [vmem:[#allocation7 + $0x168] sm:$0xff]
    %v574 = vld [vmem:[#allocation7 + $0x170] sm:$0xff]
    %v575 = vld [vmem:[#allocation7 + $0x178] sm:$0xff]
    %v576 = vld [vmem:[#allocation7 + $0x180] sm:$0xff]
    %v577 = vld [vmem:[#allocation7 + $0x188] sm:$0xff]
    %v578 = vld [vmem:[#allocation7 + $0x190] sm:$0xff]
    %v579 = vld [vmem:[#allocation7 + $0x198] sm:$0xff]
    %v580 = vld [vmem:[#allocation7 + $0x1a0] sm:$0xff]
    %v581 = vld [vmem:[#allocation7 + $0x1a8] sm:$0xff]
    %v582 = vld [vmem:[#allocation7 + $0x1b0] sm:$0xff]
    %v583 = vld [vmem:[#allocation7 + $0x1b8] sm:$0xff]
    %v584 = vld [vmem:[#allocation7 + $0x1c0] sm:$0xff]
    %v585 = vld [vmem:[#allocation7 + $0x1c8] sm:$0xff]
    %v586 = vld [vmem:[#allocation7 + $0x1d0] sm:$0xff]
    %v587 = vld [vmem:[#allocation7 + $0x1d8] sm:$0xff]
    %v588 = vld [vmem:[#allocation7 + $0x1e0] sm:$0xff]
    %v589 = vld [vmem:[#allocation7 + $0x1e8] sm:$0xff]
    %v590 = vld [vmem:[#allocation7 + $0x1f0] sm:$0xff]
    %v591 = vld [vmem:[#allocation7 + $0x1f8] sm:$0xff]
    %592 = vmatprep.subr.mxu0 %v529
    %593 = vmatpush1.msra.mxu0 %v528
    %594 = vmatprep.subr.mxu0 %v531
    %595 = vmatpush1.msra.mxu0 %v530
    %596 = vmatprep.subr.mxu0 %v533
    %597 = vmatpush1.msra.mxu0 %v532
    %598 = vmatprep.subr.mxu0 %v535
    %599 = vmatpush1.msra.mxu0 %v534
    %600 = vmatprep.subr.mxu0 %v537
    %601 = vmatpush1.msra.mxu0 %v536
    %602 = vmatprep.subr.mxu0 %v539
    %603 = vmatpush1.msra.mxu0 %v538
    %604 = vmatprep.subr.mxu0 %v541
    %605 = vmatpush1.msra.mxu0 %v540
    %606 = vmatprep.subr.mxu0 %v543
    %607 = vmatpush1.msra.mxu0 %v542
    %608 = vmatprep.subr.mxu0 %v545
    %609 = vmatpush1.msra.mxu0 %v544
    %610 = vmatprep.subr.mxu0 %v547
    %611 = vmatpush1.msra.mxu0 %v546
    %612 = vmatprep.subr.mxu0 %v549
    %613 = vmatpush1.msra.mxu0 %v548
    %614 = vmatprep.subr.mxu0 %v551
    %615 = vmatpush1.msra.mxu0 %v550
    %616 = vmatprep.subr.mxu0 %v553
    %617 = vmatpush1.msra.mxu0 %v552
    %618 = vmatprep.subr.mxu0 %v555
    %619 = vmatpush1.msra.mxu0 %v554
    %620 = vmatprep.subr.mxu0 %v557
    %621 = vmatpush1.msra.mxu0 %v556
    %622 = vmatprep.subr.mxu0 %v559
    %623 = vmatpush1.msra.mxu0 %v558
    %624 = vmatprep.subr.mxu0 %v561
    %625 = vmatpush1.msra.mxu0 %v560
    %626 = vmatprep.subr.mxu0 %v563
    %627 = vmatpush1.msra.mxu0 %v562
    %628 = vmatprep.subr.mxu0 %v565
    %629 = vmatpush1.msra.mxu0 %v564
    %630 = vmatprep.subr.mxu0 %v567
    %631 = vmatpush1.msra.mxu0 %v566
    %632 = vmatprep.subr.mxu0 %v569
    %633 = vmatpush1.msra.mxu0 %v568
    %634 = vmatprep.subr.mxu0 %v571
    %635 = vmatpush1.msra.mxu0 %v570
    %636 = vmatprep.subr.mxu0 %v573
    %637 = vmatpush1.msra.mxu0 %v572
    %638 = vmatprep.subr.mxu0 %v575
    %639 = vmatpush1.msra.mxu0 %v574
    %640 = vmatprep.subr.mxu0 %v577
    %641 = vmatpush1.msra.mxu0 %v576
    %642 = vmatprep.subr.mxu0 %v579
    %643 = vmatpush1.msra.mxu0 %v578
    %644 = vmatprep.subr.mxu0 %v581
    %645 = vmatpush1.msra.mxu0 %v580
    %646 = vmatprep.subr.mxu0 %v583
    %647 = vmatpush1.msra.mxu0 %v582
    %648 = vmatprep.subr.mxu0 %v585
    %649 = vmatpush1.msra.mxu0 %v584
    %650 = vmatprep.subr.mxu0 %v587
    %651 = vmatpush1.msra.mxu0 %v586
    %652 = vmatprep.subr.mxu0 %v589
    %653 = vmatpush1.msra.mxu0 %v588
    %654 = vmatprep.subr.mxu0 %v591
    %655 = vmatpush1.msra.mxu0 %v590
    %656 = vmatprep.mubr.f32.mxu0 %v527
    %657 = vmatmul.mubr.f32.gmra.mrb[0].mxu0 %v526
    %v658 = vpop.f32.mrb[0].mxu0
    %v659 = vadd.f32 0.0, %v658
    %v660 = vpop.f32.mrb[0].mxu0
    %v661 = vadd.f32 0.0, %v660
    %662 = vdwg.mxu0
    %v663 = vmul.f32 %v659, 1.442695
    %v664 = vpow.pop %v663
    %v665 = vmul.f32 %v661, 1.442695
    %v666 = vpow.pop %v665
    %v667 = vld [vmem:[#allocation8] sm:$0xff]
    %v668 = vld [vmem:[#allocation8 + $0x8] sm:$0xff]
    %v669 = vld [vmem:[#allocation8 + $0x10] sm:$0xff]
    %v670 = vld [vmem:[#allocation8 + $0x18] sm:$0xff]
    %v671 = vld [vmem:[#allocation8 + $0x20] sm:$0xff]
    %v672 = vld [vmem:[#allocation8 + $0x28] sm:$0xff]
    %v673 = vld [vmem:[#allocation8 + $0x30] sm:$0xff]
    %v674 = vld [vmem:[#allocation8 + $0x38] sm:$0xff]
    %v675 = vld [vmem:[#allocation8 + $0x40] sm:$0xff]
    %v676 = vld [vmem:[#allocation8 + $0x48] sm:$0xff]
    %v677 = vld [vmem:[#allocation8 + $0x50] sm:$0xff]
    %v678 = vld [vmem:[#allocation8 + $0x58] sm:$0xff]
    %v679 = vld [vmem:[#allocation8 + $0x60] sm:$0xff]
    %v680 = vld [vmem:[#allocation8 + $0x68] sm:$0xff]
    %v681 = vld [vmem:[#allocation8 + $0x70] sm:$0xff]
    %v682 = vld [vmem:[#allocation8 + $0x78] sm:$0xff]
    %v683 = vld [vmem:[#allocation8 + $0x80] sm:$0xff]
    %v684 = vld [vmem:[#allocation8 + $0x88] sm:$0xff]
    %v685 = vld [vmem:[#allocation8 + $0x90] sm:$0xff]
    %v686 = vld [vmem:[#allocation8 + $0x98] sm:$0xff]
    %v687 = vld [vmem:[#allocation8 + $0xa0] sm:$0xff]
    %v688 = vld [vmem:[#allocation8 + $0xa8] sm:$0xff]
    %v689 = vld [vmem:[#allocation8 + $0xb0] sm:$0xff]
    %v690 = vld [vmem:[#allocation8 + $0xb8] sm:$0xff]
    %v691 = vld [vmem:[#allocation8 + $0xc0] sm:$0xff]
    %v692 = vld [vmem:[#allocation8 + $0xc8] sm:$0xff]
    %v693 = vld [vmem:[#allocation8 + $0xd0] sm:$0xff]
    %v694 = vld [vmem:[#allocation8 + $0xd8] sm:$0xff]
    %v695 = vld [vmem:[#allocation8 + $0xe0] sm:$0xff]
    %v696 = vld [vmem:[#allocation8 + $0xe8] sm:$0xff]
    %v697 = vld [vmem:[#allocation8 + $0xf0] sm:$0xff]
    %v698 = vld [vmem:[#allocation8 + $0xf8] sm:$0xff]
    %699 = vmatprep.subr.mxu0 0.0
    %700 = vmatpush1.msra.mxu0 %v667
    %701 = vmatprep.subr.mxu0 0.0
    %702 = vmatpush1.msra.mxu0 %v668
    %703 = vmatprep.subr.mxu0 0.0
    %704 = vmatpush1.msra.mxu0 %v669
    %705 = vmatprep.subr.mxu0 0.0
    %706 = vmatpush1.msra.mxu0 %v670
    %707 = vmatprep.subr.mxu0 0.0
    %708 = vmatpush1.msra.mxu0 %v671
    %709 = vmatprep.subr.mxu0 0.0
    %710 = vmatpush1.msra.mxu0 %v672
    %711 = vmatprep.subr.mxu0 0.0
    %712 = vmatpush1.msra.mxu0 %v673
    %713 = vmatprep.subr.mxu0 0.0
    %714 = vmatpush1.msra.mxu0 %v674
    %715 = vmatprep.subr.mxu0 0.0
    %716 = vmatpush1.msra.mxu0 %v675
    %717 = vmatprep.subr.mxu0 0.0
    %718 = vmatpush1.msra.mxu0 %v676
    %719 = vmatprep.subr.mxu0 0.0
    %720 = vmatpush1.msra.mxu0 %v677
    %721 = vmatprep.subr.mxu0 0.0
    %722 = vmatpush1.msra.mxu0 %v678
    %723 = vmatprep.subr.mxu0 0.0
    %724 = vmatpush1.msra.mxu0 %v679
    %725 = vmatprep.subr.mxu0 0.0
    %726 = vmatpush1.msra.mxu0 %v680
    %727 = vmatprep.subr.mxu0 0.0
    %728 = vmatpush1.msra.mxu0 %v681
    %729 = vmatprep.subr.mxu0 0.0
    %730 = vmatpush1.msra.mxu0 %v682
    %731 = vmatprep.subr.mxu0 0.0
    %732 = vmatpush1.msra.mxu0 %v683
    %733 = vmatprep.subr.mxu0 0.0
    %734 = vmatpush1.msra.mxu0 %v684
    %735 = vmatprep.subr.mxu0 0.0
    %736 = vmatpush1.msra.mxu0 %v685
    %737 = vmatprep.subr.mxu0 0.0
    %738 = vmatpush1.msra.mxu0 %v686
    %739 = vmatprep.subr.mxu0 0.0
    %740 = vmatpush1.msra.mxu0 %v687
    %741 = vmatprep.subr.mxu0 0.0
    %742 = vmatpush1.msra.mxu0 %v688
    %743 = vmatprep.subr.mxu0 0.0
    %744 = vmatpush1.msra.mxu0 %v689
    %745 = vmatprep.subr.mxu0 0.0
    %746 = vmatpush1.msra.mxu0 %v690
    %747 = vmatprep.subr.mxu0 0.0
    %748 = vmatpush1.msra.mxu0 %v691
    %749 = vmatprep.subr.mxu0 0.0
    %750 = vmatpush1.msra.mxu0 %v692
    %751 = vmatprep.subr.mxu0 0.0
    %752 = vmatpush1.msra.mxu0 %v693
    %753 = vmatprep.subr.mxu0 0.0
    %754 = vmatpush1.msra.mxu0 %v694
    %755 = vmatprep.subr.mxu0 0.0
    %756 = vmatpush1.msra.mxu0 %v695
    %757 = vmatprep.subr.mxu0 0.0
    %758 = vmatpush1.msra.mxu0 %v696
    %759 = vmatprep.subr.mxu0 0.0
    %760 = vmatpush1.msra.mxu0 %v697
    %761 = vmatprep.subr.mxu0 0.0
    %762 = vmatpush1.msra.mxu0 %v698
    %763 = vmatprep.mubr.f32.mxu0 %v666
    %764 = vmatmul.mubr.f32.gmra.mrb[0].mxu0 %v664
    %v765 = vpop.f32.mrb[0].mxu0
    %v766 = vadd.f32 1e-05, %v765
    %v767 = vpop.f32.mrb[0].mxu0
    %768 = vdwg.mxu0
    %v769 = vmul.f32 %v766, 0.99998
    %770 = vst [vmem:[#allocation10] sm:$0xff] %v769
    // Predicated region
    $region38: #{_dpl_launch.1} parent=1 // pred_check
      _
    $region39: #{_dpl_launch.1} parent=1 // pred_check_branch
      %772 = sbr.rel (0) target = $region41
    $region40: #{_dpl_launch.1} parent=1 // pred_region
      %s774 = ssub.s32 128, 128
      %775 = vsyncadd [#allocation4], %s774
      %s777 = sshll.u32 [#allocation10], 4
      %s778 = int_to_ptr.vmem [resolvable:$true] %s777
      %780 = dma.vmem_to_hbm [thread:$0]  %s778, 128, %s5, [#allocation4]
    $region41: #{_dpl_launch.1} parent=1 // pred_fallthru
      _
    // Predicated region
    $region42: #{_dpl_launch.1} parent=1 // pred_check
      _
    $region43: #{_dpl_launch.1} parent=1 // pred_check_branch
      %782 = sbr.rel (0) target = $region45
    $region44: #{_dpl_launch.1} parent=1 // pred_region
      %783 = dma.done [#allocation4], 128
    $region45: #{_dpl_launch.1} parent=1 // pred_fallthru
      _
    %784 = vsyncpa [#allocation3], 1
    %785 = vsyncpa [#allocation6], 1
    %786 = vsyncpa [#allocation9], 1
    %787 = vsyncpa [#allocation4], 1

</llo_original>
